<compile_context>
chip_gen: v5e
topology: v5e:2x2
jax: 0.10.0
libtpu: 0.0.40
codegen_flags: <defaults>
</compile_context>

<pallas_src>
import functools

import jax
import jax.numpy as jnp
from jax import lax
from jax.experimental import pallas as pl
from jax.experimental.pallas import tpu as pltpu


def _conv_pad_geom(H, W, KH, KW):
    """Flattened-spatial padding geometry for the stride-1 'same' conv."""
    pad_h = (KH - 1) // 2
    pad_w = (KW - 1) // 2
    pad_lo = pad_h * W + pad_w                               # max negative offset
    pad_hi = (KH - 1 - pad_h) * W + (KW - 1 - pad_w)         # max positive offset
    pad0 = ((pad_lo + 127) // 128) * 128 if pad_lo else 0    # lane-aligned x offset
    return pad_h, pad_w, pad_lo, pad_hi, pad0


# ----------------------------------------------------------------------------
# Kernel
# ----------------------------------------------------------------------------
def _split_att_kernel(x_ref, wtaps_ref, t1_ref, w1_ref, t2_ref, w2_ref, b2_ref,
                      o_ref, pad_ref, *, H, W, KH, KW, radix, n_src, ns_lanes,
                      stack_taps):
    S = H * W
    cin = x_ref.shape[1]
    cout = wtaps_ref.shape[0]              # channels * radix
    cch = cout // radix                    # channels
    Gc = w1_ref.shape[1]                   # gap channels consumed by attention

    pad_h, pad_w, _, pad_hi, pad0 = _conv_pad_geom(H, W, KH, KW)

    # --- stage x into the zero-padded lane scratch ---------------------------
    # Pads are (re)zeroed every grid step -> no cross-step state, safe when the
    # batch axis is split across TensorCores ("parallel").
    if pad0:
        pad_ref[:, 0:pad0] = jnp.zeros((cin, pad0), pad_ref.dtype)
    if pad_hi:
        pad_ref[:, pad0 + S:pad0 + S + pad_hi] = jnp.zeros((cin, pad_hi),
                                                           pad_ref.dtype)
    pad_ref[:, pad0:pad0 + S] = x_ref[0]

    # Hoisted w-direction validity masks (H overflow lands in the zero pad, so
    # no h masks are needed; dw == 0 needs no mask at all).
    w_idx = lax.broadcasted_iota(jnp.int32, (1, S), 1) % W
    w_masks = {}
    for kw in range(KW):
        dw = kw - pad_w
        if dw < 0:
            w_masks[dw] = (w_idx + dw) >= 0
        elif dw > 0:
            w_masks[dw] = (w_idx + dw) < W

    # --- radix_conv: grouped KxK conv (BN scale folded into weights) ---------
    taps = []
    y = None
    for kh in range(KH):
        for kw in range(KW):
            dh = kh - pad_h
            dw = kw - pad_w
            off = dh * W + dw
            xs = pad_ref[:, pad0 + off:pad0 + off + S]        # x[c, s + off]
            if dw != 0:
                xs = jnp.where(w_masks[dw], xs, jnp.zeros_like(xs))
            if stack_taps:
                taps.append(xs)
            else:
                t = kh * KW + kw
                part = jnp.dot(wtaps_ref[:, t * cin:(t + 1) * cin], xs,
                               preferred_element_type=jnp.float32)
                y = part if y is None else y + part
    if stack_taps:
        # One deep contraction (K*K*Cin) keeps the 256-deep MXU busy for
        # shallow Cin instead of K*K short matmuls.
        xstk = jnp.concatenate(taps, axis=0)                  # (K*K*Cin, S)
        y = jnp.dot(wtaps_ref[...], xstk, preferred_element_type=jnp.float32)
    y = jnp.maximum(y + t1_ref[...], 0.0)                     # (Cout, S)  f32

    # --- attention branch, shrunk to what view(B, -1, 1, 1) consumes ---------
    gap = y[0:Gc, 0:ns_lanes]
    for r in range(1, radix):
        gap = gap + y[r * cch:r * cch + Gc, 0:ns_lanes]
    gap = gap.astype(w1_ref.dtype)
    a1 = jnp.dot(w1_ref[...], gap, preferred_element_type=jnp.float32)
    a1 = jnp.maximum(a1 + t2_ref[...], 0.0)                   # (Gi, Ns)
    a2 = jnp.dot(w2_ref[...], a1.astype(w2_ref.dtype),
                 preferred_element_type=jnp.float32) + b2_ref[...]
    # a2: (n_src * radix, Ns)

    # rSoftMax: only the radix-0 component at the consumed (g, c, s) positions.
    cols = []
    for rho in range(n_src):
        rows = [a2[rho * radix + r:rho * radix + r + 1, :] for r in range(radix)]
        m = rows[0]
        for r in range(1, radix):
            m = jnp.maximum(m, rows[r])
        exps = [jnp.exp(rw - m) for rw in rows]
        den = exps[0]
        for r in range(1, radix):
            den = den + exps[r]
        sm0 = exps[0] / den                                   # (1, Ns)
        take = (cout - rho * S) if rho == n_src - 1 else S
        # (1, take) lane vector -> (take, 1) sublane vector: sublane broadcast
        # to the native 8 rows, one XLU transpose, slice column 0.  Replaces
        # the old iota/select/cross-lane-reduce gather.
        col = jnp.transpose(jnp.broadcast_to(sm0[:, 0:take], (8, take)))[:, 0:1]
        cols.append(col)
    w_att = cols[0] if n_src == 1 else jnp.concatenate(cols, axis=0)   # (Cout, 1)

    # --- out = sum_r gate_r * split_r -----------------------------------------
    out = y[0:cch, :] * w_att[0:cch, :]
    for r in range(1, radix):
        out = out + y[r * cch:(r + 1) * cch, :] * w_att[r * cch:(r + 1) * cch, :]
    o_ref[0] = out.astype(o_ref.dtype)


# ----------------------------------------------------------------------------
# Wrapper
# ----------------------------------------------------------------------------
def _block_diag_dense(w, groups):
    """Grouped weight (Cout, Cin/groups, ...) -> dense block-diag (Cout, Cin, ...)."""
    cout, cin_pg = w.shape[0], w.shape[1]
    out_pg = cout // groups
    dense = jnp.zeros((cout, cin_pg * groups) + w.shape[2:], w.dtype)
    for g in range(groups):
        dense = dense.at[g * out_pg:(g + 1) * out_pg,
                         g * cin_pg:(g + 1) * cin_pg].set(w[g * out_pg:(g + 1) * out_pg])
    return dense


def split_att_block(x, params, *, radix, groups, eps=1e-5):
    """Pallas TPU forward of SplitAttBlock (stride=1, dilation=1, padding='same')."""
    B, cin, H, W = x.shape
    S = H * W
    conv_w = params["conv_w"]                       # (Cout, Cin/(groups*radix), KH, KW)
    cout, _, KH, KW = conv_w.shape                  # Cout = channels * radix
    cch = cout // radix
    ic = params["att1_w"].shape[0]
    gr = groups * radix
    f32 = jnp.float32
    wdt = x.dtype                                   # MXU operand dtype follows input

    pad_h, pad_w, pad_lo, pad_hi, pad0 = _conv_pad_geom(H, W, KH, KW)

    # ---- radix_conv weights: dense block-diag, BN scale folded, tap-major ----
    s1v = params["bn1_gamma"].astype(f32) / jnp.sqrt(params["bn1_var"].astype(f32) + eps)
    t1v = params["bn1_beta"].astype(f32) + (params["conv_b"].astype(f32)
                                            - params["bn1_mean"].astype(f32)) * s1v
    # TODO(synk): when the per-group contraction is >=256 deep, per-group
    # matmuls would avoid the groups*radix FLOP/VMEM blow-up of the dense form.
    wc = _block_diag_dense(conv_w.astype(f32), gr) * s1v[:, None, None, None]
    wtaps = jnp.transpose(wc, (0, 2, 3, 1)).reshape(cout, KH * KW * cin).astype(wdt)
    t1 = t1v.reshape(cout, 1)

    # ---- attention branch restricted to the values view(B,-1,1,1) consumes --
    cpg = cch // groups
    ic_pg = ic // groups
    n_src = -(-cout // S)                    # source rows of the flattened softmax
    # TODO(synk): radix > H*W (n_src > groups*cpg) would need radix>0 source rows.
    assert n_src <= groups * cpg, "radix > H*W is not supported"
    G_used = min(groups, -(-n_src // cpg))   # cardinal groups actually consumed
    Gi, Gc = G_used * ic_pg, G_used * cpg
    ns_lanes = S if n_src > 1 else min(S, ((cout + 127) // 128) * 128)

    s2v = params["bn2_gamma"].astype(f32) / jnp.sqrt(params["bn2_var"].astype(f32) + eps)
    t2v = params["bn2_beta"].astype(f32) + (params["att1_b"].astype(f32)
                                            - params["bn2_mean"].astype(f32)) * s2v
    w1s = params["att1_w"][:, :, 0, 0].astype(f32) * s2v[:, None]      # (IC, cpg)
    w1_used = jnp.zeros((Gi, Gc), f32)
    for g in range(G_used):
        w1_used = w1_used.at[g * ic_pg:(g + 1) * ic_pg,
                             g * cpg:(g + 1) * cpg].set(w1s[g * ic_pg:(g + 1) * ic_pg])
    t2_used = t2v[:Gi].reshape(Gi, 1)

    w2_flat = params["att2_w"][:, :, 0, 0].astype(f32)                  # (RC, IC/groups)
    b2_all = params["att2_b"].astype(f32)
    w2_used = jnp.zeros((n_src * radix, Gi), f32)
    b2_used = jnp.zeros((n_src * radix, 1), f32)
    for rho in range(n_src):
        g_i, c_i = rho // cpg, rho % cpg
        for r in range(radix):
            ch = g_i * radix * cpg + r * cpg + c_i
            w2_used = w2_used.at[rho * radix + r,
                                 g_i * ic_pg:(g_i + 1) * ic_pg].set(w2_flat[ch])
            b2_used = b2_used.at[rho * radix + r, 0].set(b2_all[ch])
    w1_used = w1_used.astype(wdt)
    w2_used = w2_used.astype(wdt)

    x3 = x.reshape(B, cin, S)                        # free view, lane-dense spatial
    itm = x.dtype.itemsize
    stack_taps = (cin < 256) and (KH * KW * cin * S * itm <= (8 << 20))

    kernel = functools.partial(_split_att_kernel, H=H, W=W, KH=KH, KW=KW,
                               radix=radix, n_src=n_src, ns_lanes=ns_lanes,
                               stack_taps=stack_taps)

    # ---- cost hint + scoped-VMEM budget --------------------------------------
    flops = B * (2 * KH * KW * cout * cin * S
                 + 2 * Gi * Gc * ns_lanes
                 + 2 * n_src * radix * Gi * ns_lanes
                 + 6 * cout * S)
    cost = pl.CostEstimate(
        flops=int(flops),
        transcendentals=int(B * n_src * radix * ns_lanes),
        bytes_accessed=int((x3.size + B * cch * S) * itm
                           + (wtaps.size + w1_used.size + w2_used.size) * itm
                           + (t1.size + t2_used.size + b2_used.size) * 4))

    weight_bytes = ((wtaps.size + w1_used.size + w2_used.size) * itm
                    + (t1.size + t2_used.size + b2_used.size) * 4)
    act_bytes = (2 * cin * S + 2 * cch * S) * itm                  # double-buffered I/O
    act_bytes += cin * (pad0 + S + pad_hi) * itm                   # pad scratch
    act_bytes += (KH * KW * cin * S * itm) if stack_taps else 0    # stacked taps
    act_bytes += 2 * cout * S * 4                                  # y (+ temporaries)
    act_bytes += (Gi + n_src * radix) * ns_lanes * 4               # attention slab
    vmem_limit = int(min(max(1.4 * (2 * weight_bytes + act_bytes), 32 << 20),
                         112 << 20))

    grid_spec = pltpu.PrefetchScalarGridSpec(
        num_scalar_prefetch=0,
        grid=(B,),
        in_specs=[
            pl.BlockSpec((1, cin, S), lambda b: (b, 0, 0)),          # x
            pl.BlockSpec(wtaps.shape, lambda b: (0, 0)),             # conv taps (scaled)
            pl.BlockSpec(t1.shape, lambda b: (0, 0)),                # shift1
            pl.BlockSpec(w1_used.shape, lambda b: (0, 0)),           # att conv1 (scaled)
            pl.BlockSpec(t2_used.shape, lambda b: (0, 0)),           # shift2
            pl.BlockSpec(w2_used.shape, lambda b: (0, 0)),           # att conv2 rows
            pl.BlockSpec(b2_used.shape, lambda b: (0, 0)),           # bias2 rows
        ],
        out_specs=pl.BlockSpec((1, cch, S), lambda b: (b, 0, 0)),
        scratch_shapes=[pltpu.VMEM((cin, pad0 + S + pad_hi), x.dtype)],
    )

    out3 = pl.pallas_call(
        kernel,
        out_shape=jax.ShapeDtypeStruct((B, cch, S), x.dtype),
        grid_spec=grid_spec,
        compiler_params=pltpu.CompilerParams(
            dimension_semantics=("parallel",),
            vmem_limit_bytes=vmem_limit),
        cost_estimate=cost,
    )(x3, wtaps, t1, w1_used, t2_used, w2_used, b2_used)

    return out3.reshape(B, cch, H, W)


# ----------------------------------------------------------------------------
# Plain-JAX reference mirroring the PyTorch module literally (eval-mode BN)
# ----------------------------------------------------------------------------
def _split_att_reference(x, params, *, radix, groups, eps=1e-5):
    dn = ("NCHW", "OIHW", "NCHW")
    hi = lax.Precision.HIGHEST
    gr = groups * radix

    def bn(z, g, b, m, v):
        return ((z - m[None, :, None, None]) / jnp.sqrt(v + eps)[None, :, None, None]
                * g[None, :, None, None] + b[None, :, None, None])

    y = lax.conv_general_dilated(x, params["conv_w"], (1, 1), "SAME",
                                 dimension_numbers=dn, feature_group_count=gr,
                                 precision=hi)
    y = y + params["conv_b"][None, :, None, None]
    y = jnp.maximum(bn(y, params["bn1_gamma"], params["bn1_beta"],
                       params["bn1_mean"], params["bn1_var"]), 0.0)

    B, rc = y.shape[:2]
    cch = rc // radix
    splits = [y[:, i * cch:(i + 1) * cch] for i in range(radix)]
    gap = sum(splits)

    a = lax.conv_general_dilated(gap, params["att1_w"], (1, 1), "VALID",
                                 dimension_numbers=dn, feature_group_count=groups,
                                 precision=hi)
    a = a + params["att1_b"][None, :, None, None]
    a = jnp.maximum(bn(a, params["bn2_gamma"], params["bn2_beta"],
                       params["bn2_mean"], params["bn2_var"]), 0.0)
    a = lax.conv_general_dilated(a, params["att2_w"], (1, 1), "VALID",
                                 dimension_numbers=dn, feature_group_count=groups,
                                 precision=hi)
    a = a + params["att2_b"][None, :, None, None]

    # rSoftMax exactly as PyTorch: view -> transpose -> softmax -> view
    t = a.reshape(B, groups, radix, -1)
    t = jnp.transpose(t, (0, 2, 1, 3))
    t = jax.nn.softmax(t, axis=1)
    t = t.reshape(B, -1, 1, 1)
    att_maps = [t[:, i * cch:(i + 1) * cch] for i in range(radix)]
    return sum(am * sp for am, sp in zip(att_maps, splits))


# ----------------------------------------------------------------------------
if __name__ == "__main__":
    B, in_channels, H, W = 2, 4, 16, 16
    channels, radix, groups = 4, 2, 1
    kernel_size = (3, 3)
    reduction_factor = 4

    gr = groups * radix
    cout = channels * radix
    ic = max(32, in_channels * radix // reduction_factor)

    key = jax.random.PRNGKey(0)
    ks = list(jax.random.split(key, 16))

    def nrm(k, shape, scale=1.0):
        return scale * jax.random.normal(k, shape, dtype=jnp.float32)

    params = {
        "conv_w": nrm(ks[0], (cout, in_channels // gr, *kernel_size), 0.3),
        "conv_b": nrm(ks[1], (cout,), 0.1),
        "bn1_gamma": 1.0 + nrm(ks[2], (cout,), 0.1),
        "bn1_beta": nrm(ks[3], (cout,), 0.1),
        "bn1_mean": nrm(ks[4], (cout,), 0.1),
        "bn1_var": 0.5 + jnp.abs(nrm(ks[5], (cout,), 0.3)),
        "att1_w": nrm(ks[6], (ic, channels // groups, 1, 1), 0.3),
        "att1_b": nrm(ks[7], (ic,), 0.1),
        "bn2_gamma": 1.0 + nrm(ks[8], (ic,), 0.1),
        "bn2_beta": nrm(ks[9], (ic,), 0.1),
        "bn2_mean": nrm(ks[10], (ic,), 0.1),
        "bn2_var": 0.5 + jnp.abs(nrm(ks[11], (ic,), 0.3)),
        "att2_w": nrm(ks[12], (cout, ic // groups, 1, 1), 0.3),
        "att2_b": nrm(ks[13], (cout,), 0.1),
    }
    x = nrm(ks[14], (B, in_channels, H, W))

    out = split_att_block(x, params, radix=radix, groups=groups)
    out = jax.block_until_ready(out)

    ref = _split_att_reference(x, params, radix=radix, groups=groups)
    assert out.shape == (B, channels, H, W) and out.dtype == x.dtype
    err = float(jnp.max(jnp.abs(out - ref)))
    assert jnp.allclose(out, ref, atol=1e-4, rtol=1e-4), f"mismatch vs reference: {err}"

    print("KERNEL_OK")
</pallas_src>

<mosaic_0001>
module attributes {stable_mosaic.version = 11 : i64} {
  func.func @_split_att_kernel(%arg0: i32, %arg1: memref<1x4x256xf32, #tpu.memory_space<vmem>>, %arg2: memref<8x36xf32, #tpu.memory_space<vmem>>, %arg3: memref<8x1xf32, #tpu.memory_space<vmem>>, %arg4: memref<32x4xf32, #tpu.memory_space<vmem>>, %arg5: memref<32x1xf32, #tpu.memory_space<vmem>>, %arg6: memref<2x32xf32, #tpu.memory_space<vmem>>, %arg7: memref<2x1xf32, #tpu.memory_space<vmem>>, %arg8: memref<1x4x256xf32, #tpu.memory_space<vmem>>, %arg9: memref<4x401xf32, #tpu.memory_space<vmem>>) attributes {dimension_semantics = [#tpu.dimension_semantics<parallel>], iteration_bounds = array<i64: 2>, scalar_prefetch = 0 : i64, scratch_operands = 1 : i64, tpu.core_type = #tpu.core_type<tc>, window_params = [{transform_indices = @transform_0, window_bounds = array<i64: 1, 4, 256>}, {pipeline_mode = #tpu.pipeline_mode<synchronous>, transform_indices = @transform_1, window_bounds = array<i64: 8, 36>}, {pipeline_mode = #tpu.pipeline_mode<synchronous>, transform_indices = @transform_2, window_bounds = array<i64: 8, 1>}, {pipeline_mode = #tpu.pipeline_mode<synchronous>, transform_indices = @transform_3, window_bounds = array<i64: 32, 4>}, {pipeline_mode = #tpu.pipeline_mode<synchronous>, transform_indices = @transform_4, window_bounds = array<i64: 32, 1>}, {pipeline_mode = #tpu.pipeline_mode<synchronous>, transform_indices = @transform_5, window_bounds = array<i64: 2, 32>}, {pipeline_mode = #tpu.pipeline_mode<synchronous>, transform_indices = @transform_6, window_bounds = array<i64: 2, 1>}, {transform_indices = @transform_7, window_bounds = array<i64: 1, 4, 256>}]} {
    %cst = arith.constant 0.000000e+00 : f32
    %0 = vector.broadcast %cst : f32 to vector<4x128xf32>
    %c0 = arith.constant 0 : index
    %c0_0 = arith.constant 0 : index
    %1 = vector.load %arg9[%c0, %c0_0] : memref<4x401xf32, #tpu.memory_space<vmem>>, vector<4x128xf32>
    tpu.vector_store %arg9[%c0, %c0_0], %0 {strides = array<i32>} : memref<4x401xf32, #tpu.memory_space<vmem>>, vector<4x128xf32>,
    %cst_1 = arith.constant 0.000000e+00 : f32
    %2 = vector.broadcast %cst_1 : f32 to vector<4x17xf32>
    %c0_2 = arith.constant 0 : index
    %c384 = arith.constant 384 : index
    %3 = vector.load %arg9[%c0_2, %c384] : memref<4x401xf32, #tpu.memory_space<vmem>>, vector<4x17xf32>
    tpu.vector_store %arg9[%c0_2, %c384], %2 {strides = array<i32>} : memref<4x401xf32, #tpu.memory_space<vmem>>, vector<4x17xf32>,
    %c0_3 = arith.constant 0 : index
    %c0_4 = arith.constant 0 : index
    %c0_5 = arith.constant 0 : index
    %4 = vector.load %arg1[%c0_3, %c0_4, %c0_5] : memref<1x4x256xf32, #tpu.memory_space<vmem>>, vector<1x4x256xf32>
    %5 = vector.shape_cast %4 : vector<1x4x256xf32> to vector<4x256xf32>
    %c0_6 = arith.constant 0 : index
    %c128 = arith.constant 128 : index
    %6 = vector.load %arg9[%c0_6, %c128] : memref<4x401xf32, #tpu.memory_space<vmem>>, vector<4x256xf32>
    tpu.vector_store %arg9[%c0_6, %c128], %5 {strides = array<i32>} : memref<4x401xf32, #tpu.memory_space<vmem>>, vector<4x256xf32>,
    %7 = tpu.iota {dimensions = array<i32: 1>} : vector<1x256xi32>
    %c16_i32 = arith.constant 16 : i32
    %c0_i32 = arith.constant 0 : i32
    %8 = arith.cmpi eq, %c16_i32, %c0_i32 : i32
    %c1_i32 = arith.constant 1 : i32
    %9 = arith.select %8, %c1_i32, %c16_i32 : i32
    %10 = vector.broadcast %9 : i32 to vector<1x256xi32>
    %11 = arith.remsi %7, %10 : vector<1x256xi32>
    %c0_i32_7 = arith.constant 0 : i32
    %12 = vector.broadcast %c0_i32_7 : i32 to vector<1x256xi32>
    %13 = arith.cmpi ne, %11, %12 : vector<1x256xi32>
    %c0_i32_8 = arith.constant 0 : i32
    %14 = vector.broadcast %c0_i32_8 : i32 to vector<1x256xi32>
    %15 = arith.cmpi slt, %11, %14 : vector<1x256xi32>
    %c0_i32_9 = arith.constant 0 : i32
    %16 = arith.cmpi slt, %9, %c0_i32_9 : i32
    %17 = vector.broadcast %16 : i1 to vector<1x256xi1>
    %18 = vector.broadcast %17 : vector<1x256xi1> to vector<1x256xi1>
    %19 = arith.xori %15, %18 : vector<1x256xi1>
    %20 = arith.andi %19, %13 : vector<1x256xi1>
    %21 = vector.broadcast %9 : i32 to vector<1x256xi32>
    %22 = arith.addi %11, %21 : vector<1x256xi32>
    %23 = arith.select %20, %22, %11 : vector<1x256xi1>, vector<1x256xi32>
    %c-1_i32 = arith.constant -1 : i32
    %24 = vector.broadcast %c-1_i32 : i32 to vector<1x256xi32>
    %25 = arith.addi %23, %24 : vector<1x256xi32>
    %c0_i32_10 = arith.constant 0 : i32
    %26 = vector.broadcast %c0_i32_10 : i32 to vector<1x256xi32>
    %27 = arith.cmpi sge, %25, %26 : vector<1x256xi32>
    %c1_i32_11 = arith.constant 1 : i32
    %28 = vector.broadcast %c1_i32_11 : i32 to vector<1x256xi32>
    %29 = arith.addi %23, %28 : vector<1x256xi32>
    %c16_i32_12 = arith.constant 16 : i32
    %30 = vector.broadcast %c16_i32_12 : i32 to vector<1x256xi32>
    %31 = arith.cmpi slt, %29, %30 : vector<1x256xi32>
    %c0_13 = arith.constant 0 : index
    %c111 = arith.constant 111 : index
    %32 = vector.load %arg9[%c0_13, %c111] : memref<4x401xf32, #tpu.memory_space<vmem>>, vector<4x256xf32>
    %cst_14 = arith.constant 0.000000e+00 : f32
    %33 = vector.broadcast %cst_14 : f32 to vector<4x256xf32>
    %34 = vector.shape_cast %27 : vector<1x256xi1> to vector<1x256xi1>
    %35 = vector.broadcast %34 : vector<1x256xi1> to vector<4x256xi1>
    %36 = arith.select %35, %32, %33 : vector<4x256xi1>, vector<4x256xf32>
    %c0_15 = arith.constant 0 : index
    %c112 = arith.constant 112 : index
    %37 = vector.load %arg9[%c0_15, %c112] : memref<4x401xf32, #tpu.memory_space<vmem>>, vector<4x256xf32>
    %c0_16 = arith.constant 0 : index
    %c113 = arith.constant 113 : index
    %38 = vector.load %arg9[%c0_16, %c113] : memref<4x401xf32, #tpu.memory_space<vmem>>, vector<4x256xf32>
    %cst_17 = arith.constant 0.000000e+00 : f32
    %39 = vector.broadcast %cst_17 : f32 to vector<4x256xf32>
    %40 = vector.shape_cast %31 : vector<1x256xi1> to vector<1x256xi1>
    %41 = vector.broadcast %40 : vector<1x256xi1> to vector<4x256xi1>
    %42 = arith.select %41, %38, %39 : vector<4x256xi1>, vector<4x256xf32>
    %c0_18 = arith.constant 0 : index
    %c127 = arith.constant 127 : index
    %43 = vector.load %arg9[%c0_18, %c127] : memref<4x401xf32, #tpu.memory_space<vmem>>, vector<4x256xf32>
    %cst_19 = arith.constant 0.000000e+00 : f32
    %44 = vector.broadcast %cst_19 : f32 to vector<4x256xf32>
    %45 = vector.shape_cast %27 : vector<1x256xi1> to vector<1x256xi1>
    %46 = vector.broadcast %45 : vector<1x256xi1> to vector<4x256xi1>
    %47 = arith.select %46, %43, %44 : vector<4x256xi1>, vector<4x256xf32>
    %c0_20 = arith.constant 0 : index
    %c128_21 = arith.constant 128 : index
    %48 = vector.load %arg9[%c0_20, %c128_21] : memref<4x401xf32, #tpu.memory_space<vmem>>, vector<4x256xf32>
    %c0_22 = arith.constant 0 : index
    %c129 = arith.constant 129 : index
    %49 = vector.load %arg9[%c0_22, %c129] : memref<4x401xf32, #tpu.memory_space<vmem>>, vector<4x256xf32>
    %cst_23 = arith.constant 0.000000e+00 : f32
    %50 = vector.broadcast %cst_23 : f32 to vector<4x256xf32>
    %51 = vector.shape_cast %31 : vector<1x256xi1> to vector<1x256xi1>
    %52 = vector.broadcast %51 : vector<1x256xi1> to vector<4x256xi1>
    %53 = arith.select %52, %49, %50 : vector<4x256xi1>, vector<4x256xf32>
    %c0_24 = arith.constant 0 : index
    %c143 = arith.constant 143 : index
    %54 = vector.load %arg9[%c0_24, %c143] : memref<4x401xf32, #tpu.memory_space<vmem>>, vector<4x256xf32>
    %cst_25 = arith.constant 0.000000e+00 : f32
    %55 = vector.broadcast %cst_25 : f32 to vector<4x256xf32>
    %56 = vector.shape_cast %27 : vector<1x256xi1> to vector<1x256xi1>
    %57 = vector.broadcast %56 : vector<1x256xi1> to vector<4x256xi1>
    %58 = arith.select %57, %54, %55 : vector<4x256xi1>, vector<4x256xf32>
    %c0_26 = arith.constant 0 : index
    %c144 = arith.constant 144 : index
    %59 = vector.load %arg9[%c0_26, %c144] : memref<4x401xf32, #tpu.memory_space<vmem>>, vector<4x256xf32>
    %c0_27 = arith.constant 0 : index
    %c145 = arith.constant 145 : index
    %60 = vector.load %arg9[%c0_27, %c145] : memref<4x401xf32, #tpu.memory_space<vmem>>, vector<4x256xf32>
    %cst_28 = arith.constant 0.000000e+00 : f32
    %61 = vector.broadcast %cst_28 : f32 to vector<4x256xf32>
    %62 = vector.shape_cast %31 : vector<1x256xi1> to vector<1x256xi1>
    %63 = vector.broadcast %62 : vector<1x256xi1> to vector<4x256xi1>
    %64 = arith.select %63, %60, %61 : vector<4x256xi1>, vector<4x256xf32>
    %65 = tpu.concatenate %36, %37, %42, %47, %48, %53, %58, %59, %64 in 0 : vector<4x256xf32>, vector<4x256xf32>, vector<4x256xf32>, vector<4x256xf32>, vector<4x256xf32>, vector<4x256xf32>, vector<4x256xf32>, vector<4x256xf32>, vector<4x256xf32> -> vector<36x256xf32>
    %c0_29 = arith.constant 0 : index
    %c0_30 = arith.constant 0 : index
    %66 = vector.load %arg2[%c0_29, %c0_30] : memref<8x36xf32, #tpu.memory_space<vmem>>, vector<8x36xf32>
    %cst_31 = arith.constant dense<0.000000e+00> : vector<8x256xf32>
    %67 = tpu.matmul %66, %65, %cst_31 {dimension_numbers = #tpu.dot_dimension_numbers<[1], [0], [0], [1], [0, 0, 1, 1], [], []>} : vector<8x36xf32>, vector<36x256xf32>, vector<8x256xf32> -> vector<8x256xf32>
    %c0_32 = arith.constant 0 : index
    %c0_33 = arith.constant 0 : index
    %68 = vector.load %arg3[%c0_32, %c0_33] : memref<8x1xf32, #tpu.memory_space<vmem>>, vector<8x1xf32>
    %69 = vector.broadcast %68 : vector<8x1xf32> to vector<8x256xf32>
    %70 = arith.addf %67, %69 : vector<8x256xf32>
    %cst_34 = arith.constant 0.000000e+00 : f32
    %71 = vector.broadcast %cst_34 : f32 to vector<8x256xf32>
    %72 = arith.maximumf %70, %71 : vector<8x256xf32>
    %73 = vector.extract_strided_slice %72 {offsets = [0, 0], sizes = [4, 128], strides = [1, 1]} : vector<8x256xf32> to vector<4x128xf32>
    %74 = vector.extract_strided_slice %72 {offsets = [4, 0], sizes = [4, 128], strides = [1, 1]} : vector<8x256xf32> to vector<4x128xf32>
    %75 = arith.addf %73, %74 : vector<4x128xf32>
    %c0_35 = arith.constant 0 : index
    %c0_36 = arith.constant 0 : index
    %76 = vector.load %arg4[%c0_35, %c0_36] : memref<32x4xf32, #tpu.memory_space<vmem>>, vector<32x4xf32>
    %cst_37 = arith.constant dense<0.000000e+00> : vector<32x128xf32>
    %77 = tpu.matmul %76, %75, %cst_37 {dimension_numbers = #tpu.dot_dimension_numbers<[1], [0], [0], [1], [0, 0, 1, 1], [], []>} : vector<32x4xf32>, vector<4x128xf32>, vector<32x128xf32> -> vector<32x128xf32>
    %c0_38 = arith.constant 0 : index
    %c0_39 = arith.constant 0 : index
    %78 = vector.load %arg5[%c0_38, %c0_39] : memref<32x1xf32, #tpu.memory_space<vmem>>, vector<32x1xf32>
    %79 = vector.broadcast %78 : vector<32x1xf32> to vector<32x128xf32>
    %80 = arith.addf %77, %79 : vector<32x128xf32>
    %cst_40 = arith.constant 0.000000e+00 : f32
    %81 = vector.broadcast %cst_40 : f32 to vector<32x128xf32>
    %82 = arith.maximumf %80, %81 : vector<32x128xf32>
    %c0_41 = arith.constant 0 : index
    %c0_42 = arith.constant 0 : index
    %83 = vector.load %arg6[%c0_41, %c0_42] : memref<2x32xf32, #tpu.memory_space<vmem>>, vector<2x32xf32>
    %cst_43 = arith.constant dense<0.000000e+00> : vector<2x128xf32>
    %84 = tpu.matmul %83, %82, %cst_43 {dimension_numbers = #tpu.dot_dimension_numbers<[1], [0], [0], [1], [0, 0, 1, 1], [], []>} : vector<2x32xf32>, vector<32x128xf32>, vector<2x128xf32> -> vector<2x128xf32>
    %c0_44 = arith.constant 0 : index
    %c0_45 = arith.constant 0 : index
    %85 = vector.load %arg7[%c0_44, %c0_45] : memref<2x1xf32, #tpu.memory_space<vmem>>, vector<2x1xf32>
    %86 = vector.broadcast %85 : vector<2x1xf32> to vector<2x128xf32>
    %87 = arith.addf %84, %86 : vector<2x128xf32>
    %88 = vector.extract_strided_slice %87 {offsets = [0, 0], sizes = [1, 128], strides = [1, 1]} : vector<2x128xf32> to vector<1x128xf32>
    %89 = vector.extract_strided_slice %87 {offsets = [1, 0], sizes = [1, 128], strides = [1, 1]} : vector<2x128xf32> to vector<1x128xf32>
    %90 = arith.maximumf %88, %89 : vector<1x128xf32>
    %91 = arith.subf %88, %90 : vector<1x128xf32>
    %92 = math.exp %91 : vector<1x128xf32>
    %93 = arith.subf %89, %90 : vector<1x128xf32>
    %94 = math.exp %93 : vector<1x128xf32>
    %95 = arith.addf %92, %94 : vector<1x128xf32>
    %96 = arith.divf %92, %95 : vector<1x128xf32>
    %97 = vector.extract_strided_slice %96 {offsets = [0, 0], sizes = [1, 8], strides = [1, 1]} : vector<1x128xf32> to vector<1x8xf32>
    %98 = vector.shape_cast %97 : vector<1x8xf32> to vector<1x8xf32>
    %99 = vector.broadcast %98 : vector<1x8xf32> to vector<8x8xf32>
    %100 = tpu.transpose %99, [1, 0] : vector<8x8xf32> -> vector<8x8xf32>
    %101 = vector.extract_strided_slice %100 {offsets = [0, 0], sizes = [8, 1], strides = [1, 1]} : vector<8x8xf32> to vector<8x1xf32>
    %102 = vector.extract_strided_slice %72 {offsets = [0, 0], sizes = [4, 256], strides = [1, 1]} : vector<8x256xf32> to vector<4x256xf32>
    %103 = vector.extract_strided_slice %101 {offsets = [0, 0], sizes = [4, 1], strides = [1, 1]} : vector<8x1xf32> to vector<4x1xf32>
    %104 = vector.broadcast %103 : vector<4x1xf32> to vector<4x256xf32>
    %105 = arith.mulf %102, %104 : vector<4x256xf32>
    %106 = vector.extract_strided_slice %72 {offsets = [4, 0], sizes = [4, 256], strides = [1, 1]} : vector<8x256xf32> to vector<4x256xf32>
    %107 = vector.extract_strided_slice %101 {offsets = [4, 0], sizes = [4, 1], strides = [1, 1]} : vector<8x1xf32> to vector<4x1xf32>
    %108 = vector.broadcast %107 : vector<4x1xf32> to vector<4x256xf32>
    %109 = arith.mulf %106, %108 : vector<4x256xf32>
    %110 = arith.addf %105, %109 : vector<4x256xf32>
    %c0_46 = arith.constant 0 : index
    %c0_47 = arith.constant 0 : index
    %c0_48 = arith.constant 0 : index
    %111 = vector.load %arg8[%c0_46, %c0_47, %c0_48] : memref<1x4x256xf32, #tpu.memory_space<vmem>>, vector<1x4x256xf32>
    %112 = vector.shape_cast %111 : vector<1x4x256xf32> to vector<4x256xf32>
    %113 = vector.shape_cast %110 : vector<4x256xf32> to vector<1x4x256xf32>
    tpu.vector_store %arg8[%c0_46, %c0_47, %c0_48], %113 {strides = array<i32>} : memref<1x4x256xf32, #tpu.memory_space<vmem>>, vector<1x4x256xf32>,
    return
  }
  func.func @transform_0(%arg0: i32) -> (i32, i32, i32) {
    %c0_i32 = arith.constant 0 : i32
    %c0_i32_0 = arith.constant 0 : i32
    %c0_i32_1 = arith.constant 0 : i32
    return %arg0, %c0_i32, %c0_i32_0 : i32, i32, i32
  }
  func.func @transform_1(%arg0: i32) -> (i32, i32) {
    %c0_i32 = arith.constant 0 : i32
    %c0_i32_0 = arith.constant 0 : i32
    %c0_i32_1 = arith.constant 0 : i32
    return %c0_i32, %c0_i32_0 : i32, i32
  }
  func.func @transform_2(%arg0: i32) -> (i32, i32) {
    %c0_i32 = arith.constant 0 : i32
    %c0_i32_0 = arith.constant 0 : i32
    %c0_i32_1 = arith.constant 0 : i32
    return %c0_i32, %c0_i32_0 : i32, i32
  }
  func.func @transform_3(%arg0: i32) -> (i32, i32) {
    %c0_i32 = arith.constant 0 : i32
    %c0_i32_0 = arith.constant 0 : i32
    %c0_i32_1 = arith.constant 0 : i32
    return %c0_i32, %c0_i32_0 : i32, i32
  }
  func.func @transform_4(%arg0: i32) -> (i32, i32) {
    %c0_i32 = arith.constant 0 : i32
    %c0_i32_0 = arith.constant 0 : i32
    %c0_i32_1 = arith.constant 0 : i32
    return %c0_i32, %c0_i32_0 : i32, i32
  }
  func.func @transform_5(%arg0: i32) -> (i32, i32) {
    %c0_i32 = arith.constant 0 : i32
    %c0_i32_0 = arith.constant 0 : i32
    %c0_i32_1 = arith.constant 0 : i32
    return %c0_i32, %c0_i32_0 : i32, i32
  }
  func.func @transform_6(%arg0: i32) -> (i32, i32) {
    %c0_i32 = arith.constant 0 : i32
    %c0_i32_0 = arith.constant 0 : i32
    %c0_i32_1 = arith.constant 0 : i32
    return %c0_i32, %c0_i32_0 : i32, i32
  }
  func.func @transform_7(%arg0: i32) -> (i32, i32, i32) {
    %c0_i32 = arith.constant 0 : i32
    %c0_i32_0 = arith.constant 0 : i32
    %c0_i32_1 = arith.constant 0 : i32
    return %arg0, %c0_i32, %c0_i32_0 : i32, i32, i32
  }
}

</mosaic_0001>

<llo_original>
// kernel: tpu_custom_call.1
$region0: #{tpu_custom_call.1}
  #allocation0 [shape = 'u32[]', space=smem, size = 0x4, offset = 0x4, fixed_abs, tag = 'smem constant byte address 0x4 - core index']
  #allocation1 [shape = 'u32[72,128]{1,0:T(1,128)}', space=vmem, size = 0x9000, scoped, tag = 'internal scratch']
  #allocation2 [shape = 'f32[4,401]{1,0:T(4,128)}', space=vmem, size = 0x2000, scoped, tag = 'scratch operand']
  %s0 = inlined_call_operand.vmem [shape: f32[2,4,256], index: 0, kind: input, shape index: {}]
  %s1 = inlined_call_operand.vmem [shape: f32[8,36], index: 1, kind: input, shape index: {}]
  %s2 = inlined_call_operand.vmem [shape: f32[8,1], index: 2, kind: input, shape index: {}]
  %s3 = inlined_call_operand.vmem [shape: f32[32,4], index: 3, kind: input, shape index: {}]
  %s4 = inlined_call_operand.vmem [shape: f32[32,1], index: 4, kind: input, shape index: {}]
  %s5 = inlined_call_operand.vmem [shape: f32[2,32], index: 5, kind: input, shape index: {}]
  %s6 = inlined_call_operand.vmem [shape: f32[2,1], index: 6, kind: input, shape index: {}]
  %s7 = inlined_call_operand.hbm [shape: f32[2,4,256], index: 7, kind: output, shape index: {}]
  %s8 = sld [smem:[#allocation0]]
  $region61: #{tpu_custom_call.1} parent=0
    _
  %s10 = ssub.s32 1, %s8
  %s11 = scalar_select 0, %s10, %s8
  $region1: #{tpu_custom_call.1} parent=0
    #allocation3 [shape = 'u8[8192]{0}', space=vmem, size = 0x2000, scoped, tag = 'output window, operand 0']
    #allocation4 [shape = 's32[2]{0}', space=sflag, size = 0x8, scoped, tag = 'scoped memory for tpu_custom_call.1']
    %12 = vsyncpa [#allocation4], 0
    %s13 = scalar_lea.sflag [#allocation4], 1
    %14 = vsyncpa %s13, 0
    loop: start=0, step=1, limit=4
    $region2: #{tpu_custom_call.1} parent=1 // loop_pre_header
      _
    $region3: #{tpu_custom_call.1} parent=1 // loop_header
      %s16 = sphi 0, %s20
      %p17 = scmp.ge.s32.totalorder %s16, 4
      %s26 = sphi 0, %s28
      %s29 = sphi 0, %s26
      %s30 = sphi 0, %s29
      %s46 = sphi 0, %s30
      %s50 = sphi 0, %s50
      %s52 = sphi 0, %s50
      %s53 = sphi 0, %s52
      %s67 = sphi 0, %s53
      %s71 = sphi 0, %s71
      %s73 = sphi 0, %s71
      %s74 = sphi 0, %s73
      %s88 = sphi 0, %s74
      %s92 = sphi 0, %s92
      %s94 = sphi 0, %s92
      %s95 = sphi 0, %s94
      %s109 = sphi 0, %s95
      %s113 = sphi 0, %s113
      %s115 = sphi 0, %s113
      %s116 = sphi 0, %s115
      %s130 = sphi 0, %s116
      %s134 = sphi 0, %s134
      %s136 = sphi 0, %s134
      %s137 = sphi 0, %s136
      %s151 = sphi 0, %s137
      %s155 = sphi 0, %s155
      %s157 = sphi 0, %s155
      %s158 = sphi 0, %s157
      %s172 = sphi 0, %s158
      %s178 = sphi 0, %s180
      %s181 = sphi 0, %s178
      %s182 = sphi 0, %s181
      %s198 = sphi 0, %s182
    $region4: #{tpu_custom_call.1} parent=1 // loop_header_branch
      %19 = sbr.rel (%p17) target = $region8
    $region5: #{tpu_custom_call.1} parent=1 // loop_body
      %s21 = ssub.s32 %s16, 1
      %s22 = ssub.s32 %s16, 2
      %s23 = sadd.s32 %s16, 1
      %s24 = ssub.s32 %s16, %s23
      %p25 = scmp.eq.s32.totalorder %s24, 0
      %s27 = sadd.s32 %s26, 1
      %s28 = scalar_select %p25, %s26, %s27
      %p31 = pneg %p25
      %p32 = scmp.eq.s32.totalorder %s16, 1
      %p33 = por %p31, %p32
      %p34 = scmp.ne.s32.totalorder %s26, %s29
      %p35 = scmp.eq.s32.totalorder %s16, 0
      %p36 = por %p34, %p35
      %p37 = scmp.ne.s32.totalorder %s26, %s29
      %p38 = scmp.eq.s32.totalorder %s21, 1
      %p39 = por %p37, %p38
      %p40 = scmp.ne.s32.totalorder %s29, %s30
      %p41 = scmp.eq.s32.totalorder %s21, 0
      %p42 = por %p40, %p41
      %p43 = scmp.ne.s32.totalorder %s29, %s30
      %p44 = scmp.eq.s32.totalorder %s22, 1
      %p45 = por %p43, %p44
      %p47 = scmp.ne.s32.totalorder %s30, %s46
      %p48 = scmp.eq.s32.totalorder %s22, 0
      %p49 = por %p47, %p48
      %s51 = sadd.s32 %s50, 1
      %p54 = scmp.eq.s32.totalorder %s16, 1
      %p55 = scmp.ne.s32.totalorder %s50, %s52
      %p56 = scmp.eq.s32.totalorder %s16, 0
      %p57 = por %p55, %p56
      %p58 = scmp.ne.s32.totalorder %s50, %s52
      %p59 = scmp.eq.s32.totalorder %s21, 1
      %p60 = por %p58, %p59
      %p61 = scmp.ne.s32.totalorder %s52, %s53
      %p62 = scmp.eq.s32.totalorder %s21, 0
      %p63 = por %p61, %p62
      %p64 = scmp.ne.s32.totalorder %s52, %s53
      %p65 = scmp.eq.s32.totalorder %s22, 1
      %p66 = por %p64, %p65
      %p68 = scmp.ne.s32.totalorder %s53, %s67
      %p69 = scmp.eq.s32.totalorder %s22, 0
      %p70 = por %p68, %p69
      %s72 = sadd.s32 %s71, 1
      %p75 = scmp.eq.s32.totalorder %s16, 1
      %p76 = scmp.ne.s32.totalorder %s71, %s73
      %p77 = scmp.eq.s32.totalorder %s16, 0
      %p78 = por %p76, %p77
      %p79 = scmp.ne.s32.totalorder %s71, %s73
      %p80 = scmp.eq.s32.totalorder %s21, 1
      %p81 = por %p79, %p80
      %p82 = scmp.ne.s32.totalorder %s73, %s74
      %p83 = scmp.eq.s32.totalorder %s21, 0
      %p84 = por %p82, %p83
      %p85 = scmp.ne.s32.totalorder %s73, %s74
      %p86 = scmp.eq.s32.totalorder %s22, 1
      %p87 = por %p85, %p86
      %p89 = scmp.ne.s32.totalorder %s74, %s88
      %p90 = scmp.eq.s32.totalorder %s22, 0
      %p91 = por %p89, %p90
      %s93 = sadd.s32 %s92, 1
      %p96 = scmp.eq.s32.totalorder %s16, 1
      %p97 = scmp.ne.s32.totalorder %s92, %s94
      %p98 = scmp.eq.s32.totalorder %s16, 0
      %p99 = por %p97, %p98
      %p100 = scmp.ne.s32.totalorder %s92, %s94
      %p101 = scmp.eq.s32.totalorder %s21, 1
      %p102 = por %p100, %p101
      %p103 = scmp.ne.s32.totalorder %s94, %s95
      %p104 = scmp.eq.s32.totalorder %s21, 0
      %p105 = por %p103, %p104
      %p106 = scmp.ne.s32.totalorder %s94, %s95
      %p107 = scmp.eq.s32.totalorder %s22, 1
      %p108 = por %p106, %p107
      %p110 = scmp.ne.s32.totalorder %s95, %s109
      %p111 = scmp.eq.s32.totalorder %s22, 0
      %p112 = por %p110, %p111
      %s114 = sadd.s32 %s113, 1
      %p117 = scmp.eq.s32.totalorder %s16, 1
      %p118 = scmp.ne.s32.totalorder %s113, %s115
      %p119 = scmp.eq.s32.totalorder %s16, 0
      %p120 = por %p118, %p119
      %p121 = scmp.ne.s32.totalorder %s113, %s115
      %p122 = scmp.eq.s32.totalorder %s21, 1
      %p123 = por %p121, %p122
      %p124 = scmp.ne.s32.totalorder %s115, %s116
      %p125 = scmp.eq.s32.totalorder %s21, 0
      %p126 = por %p124, %p125
      %p127 = scmp.ne.s32.totalorder %s115, %s116
      %p128 = scmp.eq.s32.totalorder %s22, 1
      %p129 = por %p127, %p128
      %p131 = scmp.ne.s32.totalorder %s116, %s130
      %p132 = scmp.eq.s32.totalorder %s22, 0
      %p133 = por %p131, %p132
      %s135 = sadd.s32 %s134, 1
      %p138 = scmp.eq.s32.totalorder %s16, 1
      %p139 = scmp.ne.s32.totalorder %s134, %s136
      %p140 = scmp.eq.s32.totalorder %s16, 0
      %p141 = por %p139, %p140
      %p142 = scmp.ne.s32.totalorder %s134, %s136
      %p143 = scmp.eq.s32.totalorder %s21, 1
      %p144 = por %p142, %p143
      %p145 = scmp.ne.s32.totalorder %s136, %s137
      %p146 = scmp.eq.s32.totalorder %s21, 0
      %p147 = por %p145, %p146
      %p148 = scmp.ne.s32.totalorder %s136, %s137
      %p149 = scmp.eq.s32.totalorder %s22, 1
      %p150 = por %p148, %p149
      %p152 = scmp.ne.s32.totalorder %s137, %s151
      %p153 = scmp.eq.s32.totalorder %s22, 0
      %p154 = por %p152, %p153
      %s156 = sadd.s32 %s155, 1
      %p159 = scmp.eq.s32.totalorder %s16, 1
      %p160 = scmp.ne.s32.totalorder %s155, %s157
      %p161 = scmp.eq.s32.totalorder %s16, 0
      %p162 = por %p160, %p161
      %p163 = scmp.ne.s32.totalorder %s155, %s157
      %p164 = scmp.eq.s32.totalorder %s21, 1
      %p165 = por %p163, %p164
      %p166 = scmp.ne.s32.totalorder %s157, %s158
      %p167 = scmp.eq.s32.totalorder %s21, 0
      %p168 = por %p166, %p167
      %p169 = scmp.ne.s32.totalorder %s157, %s158
      %p170 = scmp.eq.s32.totalorder %s22, 1
      %p171 = por %p169, %p170
      %p173 = scmp.ne.s32.totalorder %s158, %s172
      %p174 = scmp.eq.s32.totalorder %s22, 0
      %p175 = por %p173, %p174
      %s176 = ssub.s32 %s16, %s23
      %p177 = scmp.eq.s32.totalorder %s176, 0
      %s179 = sadd.s32 %s178, 1
      %s180 = scalar_select %p177, %s178, %s179
      %p183 = pneg %p177
      %p184 = scmp.eq.s32.totalorder %s16, 1
      %p185 = por %p183, %p184
      %p186 = scmp.ne.s32.totalorder %s178, %s181
      %p187 = scmp.eq.s32.totalorder %s16, 0
      %p188 = por %p186, %p187
      %p189 = scmp.ne.s32.totalorder %s178, %s181
      %p190 = scmp.eq.s32.totalorder %s21, 1
      %p191 = por %p189, %p190
      %p192 = scmp.ne.s32.totalorder %s181, %s182
      %p193 = scmp.eq.s32.totalorder %s21, 0
      %p194 = por %p192, %p193
      %p195 = scmp.ne.s32.totalorder %s181, %s182
      %p196 = scmp.eq.s32.totalorder %s22, 1
      %p197 = por %p195, %p196
      %p199 = scmp.ne.s32.totalorder %s182, %s198
      %p200 = scmp.eq.s32.totalorder %s22, 0
      %p201 = por %p199, %p200
      %p202 = scmp.le.s32.totalorder 1, %s16
      %p203 = scmp.lt.s32.totalorder %s16, 3
      %p204 = pnand %p202, %p203
      %p205 = pneg %p204
      // Predicated region
      $region9: #{tpu_custom_call.1} parent=5 // pred_check
        _
      $region10: #{tpu_custom_call.1} parent=5 // pred_check_branch
        %207 = sbr.rel (%p204) target = $region12
      $region11: #{tpu_custom_call.1} parent=5 // pred_region
        %s208 = ssub.s32 %s16, 1
        // Predicated region
        $region13: #{tpu_custom_call.1} parent=11 // pred_check
          %p209 = pneg %p63
        $region14: #{tpu_custom_call.1} parent=11 // pred_check_branch
          %211 = sbr.rel (%p209) target = $region16
        $region15: #{tpu_custom_call.1} parent=11 // pred_region
          _
        $region16: #{tpu_custom_call.1} parent=11 // pred_fallthru
          _
        // Predicated region
        $region17: #{tpu_custom_call.1} parent=11 // pred_check
          %p212 = pneg %p84
        $region18: #{tpu_custom_call.1} parent=11 // pred_check_branch
          %214 = sbr.rel (%p212) target = $region20
        $region19: #{tpu_custom_call.1} parent=11 // pred_region
          _
        $region20: #{tpu_custom_call.1} parent=11 // pred_fallthru
          _
        // Predicated region
        $region21: #{tpu_custom_call.1} parent=11 // pred_check
          %p215 = pneg %p105
        $region22: #{tpu_custom_call.1} parent=11 // pred_check_branch
          %217 = sbr.rel (%p215) target = $region24
        $region23: #{tpu_custom_call.1} parent=11 // pred_region
          _
        $region24: #{tpu_custom_call.1} parent=11 // pred_fallthru
          _
        // Predicated region
        $region25: #{tpu_custom_call.1} parent=11 // pred_check
          %p218 = pneg %p126
        $region26: #{tpu_custom_call.1} parent=11 // pred_check_branch
          %220 = sbr.rel (%p218) target = $region28
        $region27: #{tpu_custom_call.1} parent=11 // pred_region
          _
        $region28: #{tpu_custom_call.1} parent=11 // pred_fallthru
          _
        // Predicated region
        $region29: #{tpu_custom_call.1} parent=11 // pred_check
          %p221 = pneg %p147
        $region30: #{tpu_custom_call.1} parent=11 // pred_check_branch
          %223 = sbr.rel (%p221) target = $region32
        $region31: #{tpu_custom_call.1} parent=11 // pred_region
          _
        $region32: #{tpu_custom_call.1} parent=11 // pred_fallthru
          _
        // Predicated region
        $region33: #{tpu_custom_call.1} parent=11 // pred_check
          %p224 = pneg %p168
        $region34: #{tpu_custom_call.1} parent=11 // pred_check_branch
          %226 = sbr.rel (%p224) target = $region36
        $region35: #{tpu_custom_call.1} parent=11 // pred_region
          _
        $region36: #{tpu_custom_call.1} parent=11 // pred_fallthru
          _
      $region12: #{tpu_custom_call.1} parent=5 // pred_fallthru
        _
      %p227 = scmp.lt.s32.totalorder %s16, 2
      // Predicated region
      $region37: #{tpu_custom_call.1} parent=5 // pred_check
        %p228 = pneg %p227
      $region38: #{tpu_custom_call.1} parent=5 // pred_check_branch
        %230 = sbr.rel (%p228) target = $region40
      $region39: #{tpu_custom_call.1} parent=5 // pred_region
        // Predicated region
        $region41: #{tpu_custom_call.1} parent=39 // pred_check
          %p231 = pneg %p36
        $region42: #{tpu_custom_call.1} parent=39 // pred_check_branch
          %233 = sbr.rel (%p231) target = $region44
        $region43: #{tpu_custom_call.1} parent=39 // pred_region
          %p234 = scmp.lt.s32.totalorder %s16, 1
          %s235 = scalar_select %p234, %s16, 1
          %s236 = smul.addr %s235, 2
          %s237 = smul.addr %s236, 4
          %s238 = scalar_lea.vmem %s0, %s237
        $region44: #{tpu_custom_call.1} parent=39 // pred_fallthru
          _
      $region40: #{tpu_custom_call.1} parent=5 // pred_fallthru
        _
      %p239 = scmp.le.s32.totalorder 1, %s16
      %p240 = scmp.lt.s32.totalorder %s16, 3
      %p241 = pnand %p239, %p240
      %p242 = pneg %p241
      // Predicated region
      $region45: #{tpu_custom_call.1} parent=5 // pred_check
        _
      $region46: #{tpu_custom_call.1} parent=5 // pred_check_branch
        %244 = sbr.rel (%p241) target = $region48
      $region47: #{tpu_custom_call.1} parent=5 // pred_region
        %s245 = ssub.s32 %s16, 1
        %p246 = scmp.lt.s32.totalorder %s21, 1
        %s247 = scalar_select %p246, %s21, 1
        %s248 = smul.addr %s247, 2
        %s249 = smul.addr %s248, 4
        %s250 = scalar_lea.vmem %s0, %s249
        %p251 = pneg %p42
        %p252 = pneg %p39
        %p253 = pneg %p63
        %p254 = pneg %p60
        %p255 = pneg %p84
        %p256 = pneg %p81
        %p257 = pneg %p105
        %p258 = pneg %p102
        %p259 = pneg %p126
        %p260 = pneg %p123
        %p261 = pneg %p147
        %p262 = pneg %p144
        %p263 = pneg %p168
        %p264 = pneg %p165
        %p265 = pneg %p194
        %p266 = pneg %p191
        %s267 = sand.u32 %s181, 1
        %s268 = scalar_lea.sflag [#allocation4], %s267
        %s269 = sand.u32 %s181, 1
        %s270 = smul.addr %s269, 8
        %s271 = scalar_lea.vmem [#allocation3], %s270
        %p272 = scmp.lt.s32.totalorder %s21, 1
        %s273 = scalar_select %p272, %s21, 1
        %s274 = smul.addr %s273, 2
        %s275 = smul.addr %s274, 4
        %s276 = scalar_lea.vmem %s0, %s275
        %277 = vst [vmem:[#allocation2] sm:$0xf] 0.0
        %vm278 = vcmask 134144
        %279 = vst.msk [vmem:[#allocation2 + $0xc] sm:$0xf] %vm278, 0.0
        %v280 = vld [vmem:[%s276] sm:$0xff]
        %281 = vst [vmem:[#allocation2 + $0x4] sm:$0xff] %v280
        %v282 = vlaneseq
        %v283 = vand.u32 %v282, 127
        %v284 = vadd.s32 %v283, 128
        %vm285 = vcmp.lt.s32.totalorder %v283, 0
        %v286 = vsub.s32 0, %v283
        %v287 = vsel %vm285, %v286, %v283
        %v288 = vshrl.u32 %v287, 4
        %v289 = vand.u32 %v287, 15
        %v290 = vsub.s32 0, %v289
        %v291 = vsel %vm285, %v290, %v289
        %vm292 = vcmp.lt.s32.totalorder %v284, 0
        %v293 = vsub.s32 0, %v284
        %v294 = vsel %vm292, %v293, %v284
        %v295 = vshrl.u32 %v294, 4
        %v296 = vand.u32 %v294, 15
        %v297 = vsub.s32 0, %v296
        %v298 = vsel %vm292, %v297, %v296
        %vm299 = vcmp.ne.s32.totalorder %v291, 0
        %vm300 = vcmp.ne.s32.totalorder %v298, 0
        %vm301 = vcmp.lt.s32.totalorder %v291, 0
        %vm302 = vcmp.lt.s32.totalorder %v298, 0
        %vm303 = vmand %vm301, %vm299
        %vm304 = vmand %vm302, %vm300
        %v305 = vadd.s32 %v291, 16
        %v306 = vadd.s32 %v298, 16
        %v307 = vsel %vm303, %v305, %v291
        %v308 = vsel %vm304, %v306, %v298
        %v309 = vadd.s32 %v307, 4294967295
        %v310 = vadd.s32 %v308, 4294967295
        %vm311 = vcmp.ge.s32.totalorder %v309, 0
        %vm312 = vcmp.ge.s32.totalorder %v310, 0
        %v313 = vadd.s32 %v307, 1
        %v314 = vadd.s32 %v308, 1
        %vm315 = vcmp.lt.s32.totalorder %v313, 16
        %vm316 = vcmp.lt.s32.totalorder %v314, 16
        %v317 = vld [vmem:[#allocation2] sm:$0xff]
        %v318 = vld [vmem:[#allocation2 + $0x8] sm:$0xf]
        %v319 = vsel %vm311, 1, 0
        %v320 = vsel %vm312, 1, 0
        %vm321 = vcmp.eq.s32.totalorder %v319, 1
        %vm322 = vcmp.eq.s32.totalorder %v320, 1
        %325 = vst [vmem:[#allocation1] ss:$2 sm:$0xff] %v317
        %s326 = scalar_lea.vmem [#allocation1], 16
        %327 = vst [vmem:[%s326] ss:$2 sm:$0xff] %v318
        %v328 = vld.sshfl [vmem:[#allocation1] sm:$0xff pattern:$0x75316420]
        %v329 = vld.sshfl [vmem:[#allocation1 + $0x8] sm:$0xff pattern:$0x75316420]
        %v330 = vld.sshfl [vmem:[#allocation1 + $0x10] sm:$0xff pattern:$0x75316420]
        %331 = vrot.lane.b32.xlu0 %v328, 17
        %v332 = vpop.permute.xlu0 %331
        %333 = vrot.lane.b32.xlu0 %v329, 17
        %v334 = vpop.permute.xlu0 %333
        %335 = vrot.lane.b32.xlu0 %v330, 17
        %v336 = vpop.permute.xlu0 %335
        %vm337 = vcmask 138240
        %v338 = vsel %vm337, %v332, %v334
        %v339 = vsel %vm337, %v334, %v336
        %v342 = vsel %vm321, %v338, 0.0
        %v343 = vsel %vm322, %v339, 0.0
        %v344 = vld [vmem:[#allocation2] sm:$0xff]
        %v345 = vld [vmem:[#allocation2 + $0x8] sm:$0xf]
        %v346 = vsel %vm315, 1, 0
        %v347 = vsel %vm316, 1, 0
        %vm348 = vcmp.eq.s32.totalorder %v346, 1
        %vm349 = vcmp.eq.s32.totalorder %v347, 1
        %352 = vst [vmem:[#allocation1] ss:$2 sm:$0xff] %v344
        %s353 = scalar_lea.vmem [#allocation1], 16
        %354 = vst [vmem:[%s353] ss:$2 sm:$0xff] %v345
        %v355 = vld.sshfl [vmem:[#allocation1] sm:$0xff pattern:$0x75316420]
        %v356 = vld.sshfl [vmem:[#allocation1 + $0x8] sm:$0xff pattern:$0x75316420]
        %v357 = vld.sshfl [vmem:[#allocation1 + $0x10] sm:$0xff pattern:$0x75316420]
        %358 = vrot.lane.b32.xlu0 %v355, 15
        %v359 = vpop.permute.xlu0 %358
        %360 = vrot.lane.b32.xlu0 %v356, 15
        %v361 = vpop.permute.xlu0 %360
        %362 = vrot.lane.b32.xlu0 %v357, 15
        %v363 = vpop.permute.xlu0 %362
        %vm364 = vcmask 121856
        %v365 = vsel %vm364, %v359, %v361
        %v366 = vsel %vm364, %v361, %v363
        %v369 = vsel %vm348, %v365, 0.0
        %v370 = vsel %vm349, %v366, 0.0
        %v371 = vld [vmem:[#allocation2] sm:$0xff]
        %v372 = vld [vmem:[#allocation2 + $0x8] sm:$0xf]
        %375 = vst [vmem:[#allocation1] ss:$2 sm:$0xff] %v371
        %s376 = scalar_lea.vmem [#allocation1], 16
        %377 = vst [vmem:[%s376] ss:$2 sm:$0xff] %v372
        %v378 = vld.sshfl [vmem:[#allocation1] sm:$0xff pattern:$0x75316420]
        %v379 = vld.sshfl [vmem:[#allocation1 + $0x8] sm:$0xff pattern:$0x75316420]
        %v380 = vld.sshfl [vmem:[#allocation1 + $0x10] sm:$0xff pattern:$0x75316420]
        %381 = vrot.lane.b32.xlu0 %v378, 1
        %v382 = vpop.permute.xlu0 %381
        %383 = vrot.lane.b32.xlu0 %v379, 1
        %v384 = vpop.permute.xlu0 %383
        %385 = vrot.lane.b32.xlu0 %v380, 1
        %v386 = vpop.permute.xlu0 %385
        %vm387 = vcmask 7168
        %v388 = vsel %vm387, %v382, %v384
        %v389 = vsel %vm387, %v384, %v386
        %v392 = vsel %vm321, %v388, 0.0
        %v393 = vsel %vm322, %v389, 0.0
        %v394 = vld [vmem:[#allocation2 + $0x4] sm:$0xff]
        %v395 = vld [vmem:[#allocation2 + $0xc] sm:$0xf]
        %398 = vst [vmem:[#allocation1] ss:$2 sm:$0xff] %v394
        %s399 = scalar_lea.vmem [#allocation1], 16
        %400 = vst [vmem:[%s399] ss:$2 sm:$0xff] %v395
        %v401 = vld.sshfl [vmem:[#allocation1] sm:$0xff pattern:$0x75316420]
        %v402 = vld.sshfl [vmem:[#allocation1 + $0x8] sm:$0xff pattern:$0x75316420]
        %v403 = vld.sshfl [vmem:[#allocation1 + $0x10] sm:$0xff pattern:$0x75316420]
        %404 = vrot.lane.b32.xlu0 %v401, 127
        %v405 = vpop.permute.xlu0 %404
        %406 = vrot.lane.b32.xlu0 %v402, 127
        %v407 = vpop.permute.xlu0 %406
        %408 = vrot.lane.b32.xlu0 %v403, 127
        %v409 = vpop.permute.xlu0 %408
        %vm410 = vcmask 1039360
        %v411 = vsel %vm410, %v405, %v407
        %v412 = vsel %vm410, %v407, %v409
        %v415 = vsel %vm348, %v411, 0.0
        %v416 = vsel %vm349, %v412, 0.0
        %v417 = vld [vmem:[#allocation2 + $0x4] sm:$0xff]
        %v418 = vld [vmem:[#allocation2 + $0xc] sm:$0xf]
        %421 = vst [vmem:[#allocation1] ss:$2 sm:$0xff] %v417
        %s422 = scalar_lea.vmem [#allocation1], 16
        %423 = vst [vmem:[%s422] ss:$2 sm:$0xff] %v418
        %v424 = vld.sshfl [vmem:[#allocation1] sm:$0xff pattern:$0x75316420]
        %v425 = vld.sshfl [vmem:[#allocation1 + $0x8] sm:$0xff pattern:$0x75316420]
        %v426 = vld.sshfl [vmem:[#allocation1 + $0x10] sm:$0xff pattern:$0x75316420]
        %427 = vrot.lane.b32.xlu0 %v424, 113
        %v428 = vpop.permute.xlu0 %427
        %429 = vrot.lane.b32.xlu0 %v425, 113
        %v430 = vpop.permute.xlu0 %429
        %431 = vrot.lane.b32.xlu0 %v426, 113
        %v432 = vpop.permute.xlu0 %431
        %vm433 = vcmask 924672
        %v434 = vsel %vm433, %v428, %v430
        %v435 = vsel %vm433, %v430, %v432
        %v438 = vsel %vm321, %v434, 0.0
        %v439 = vsel %vm322, %v435, 0.0
        %v440 = vld [vmem:[#allocation2 + $0x4] sm:$0xff]
        %v441 = vld [vmem:[#allocation2 + $0xc] sm:$0xf]
        %444 = vst [vmem:[#allocation1] ss:$2 sm:$0xff] %v440
        %s445 = scalar_lea.vmem [#allocation1], 16
        %446 = vst [vmem:[%s445] ss:$2 sm:$0xff] %v441
        %v447 = vld.sshfl [vmem:[#allocation1] sm:$0xff pattern:$0x75316420]
        %v448 = vld.sshfl [vmem:[#allocation1 + $0x8] sm:$0xff pattern:$0x75316420]
        %v449 = vld.sshfl [vmem:[#allocation1 + $0x10] sm:$0xff pattern:$0x75316420]
        %450 = vrot.lane.b32.xlu0 %v447, 111
        %v451 = vpop.permute.xlu0 %450
        %452 = vrot.lane.b32.xlu0 %v448, 111
        %v453 = vpop.permute.xlu0 %452
        %454 = vrot.lane.b32.xlu0 %v449, 111
        %v455 = vpop.permute.xlu0 %454
        %vm456 = vcmask 908288
        %v457 = vsel %vm456, %v451, %v453
        %v458 = vsel %vm456, %v453, %v455
        %v461 = vsel %vm348, %v457, 0.0
        %v462 = vsel %vm349, %v458, 0.0
        %s463 = scalar_lea.vmem [#allocation1], 1
        %464 = vst [vmem:[%s463] ss:$2 sm:$0xff] %v344
        %s465 = scalar_lea.vmem [#allocation1], 17
        %466 = vst [vmem:[%s465] ss:$2 sm:$0xff] %v345
        %v467 = vld.sshfl [vmem:[#allocation1] sm:$0xff pattern:$0x75316420]
        %v468 = vld.sshfl [vmem:[#allocation1 + $0x8] sm:$0xff pattern:$0x75316420]
        %v469 = vld.sshfl [vmem:[#allocation1 + $0x10] sm:$0xff pattern:$0x75316420]
        %470 = vrot.lane.b32.xlu0 %v467, 16
        %v471 = vpop.permute.xlu0 %470
        %472 = vrot.lane.b32.xlu0 %v468, 16
        %v473 = vpop.permute.xlu0 %472
        %474 = vrot.lane.b32.xlu0 %v469, 16
        %v475 = vpop.permute.xlu0 %474
        %vm476 = vcmask 130048
        %v477 = vsel %vm476, %v471, %v473
        %v478 = vsel %vm476, %v473, %v475
        %v483 = vrot.slane %v392, 4
        %v484 = vrot.slane %v393, 4
        %487 = vst [vmem:[#allocation1] ss:$2 sm:$0xff] %v394
        %v488 = vld.sshfl [vmem:[#allocation1] sm:$0xff pattern:$0x75316420]
        %v489 = vld.sshfl [vmem:[#allocation1 + $0x8] sm:$0xff pattern:$0x75316420]
        %v494 = vrot.slane %v415, 4
        %v495 = vrot.slane %v416, 4
        %s498 = scalar_lea.vmem [#allocation1], 1
        %499 = vst [vmem:[%s498] ss:$2 sm:$0xff] %v440
        %s500 = scalar_lea.vmem [#allocation1], 17
        %501 = vst [vmem:[%s500] ss:$2 sm:$0xff] %v441
        %v502 = vld.sshfl [vmem:[#allocation1] sm:$0xff pattern:$0x75316420]
        %v503 = vld.sshfl [vmem:[#allocation1 + $0x8] sm:$0xff pattern:$0x75316420]
        %v504 = vld.sshfl [vmem:[#allocation1 + $0x10] sm:$0xff pattern:$0x75316420]
        %505 = vrot.lane.b32.xlu0 %v502, 112
        %v506 = vpop.permute.xlu0 %505
        %507 = vrot.lane.b32.xlu0 %v503, 112
        %v508 = vpop.permute.xlu0 %507
        %509 = vrot.lane.b32.xlu0 %v504, 112
        %v510 = vpop.permute.xlu0 %509
        %vm511 = vcmask 916480
        %v512 = vsel %vm511, %v506, %v508
        %v513 = vsel %vm511, %v508, %v510
        %vm516 = vcmask 1043456
        %v517 = vsel %vm516, %v342, %v477
        %v518 = vsel %vm516, %v343, %v478
        %v519 = vsel %vm516, %v369, %v483
        %v520 = vsel %vm516, %v370, %v484
        %v521 = vsel %vm516, %v488, %v494
        %v522 = vsel %vm516, %v489, %v495
        %v523 = vsel %vm516, %v438, %v512
        %v524 = vsel %vm516, %v439, %v513
        %v525 = vld [vmem:[%s1] sm:$0xff]
        %v526 = vld [vmem:[%s2] sm:$0xff]
        %528 = vset.pattern.permute.xlu0 0
        %529 = vperm.xlu0 %528, %v526
        %v530 = vpop.permute.xlu0 %529
        %vm532 = vcmask 293888
        %v534 = vsel %vm532, %v525, 0
        %v537 = vsel %vm516, %v461, 0
        %v540 = vsel %vm516, %v462, 0
        %542 = vmatpush.msra.mxu0 0.0
        %543 = vmatpush.msra.mxu0 0.0
        %544 = vmatpush.msra.mxu0 0.0
        %545 = vmatpush.msra.mxu0 0.0
        %546 = vmatpush.msra.mxu0 0.0
        %547 = vmatpush.msra.mxu0 0.0
        %548 = vmatpush.msra.mxu0 0.0
        %549 = vmatpush.msra.mxu0 0.0
        %550 = vmatpush.msra.mxu0 0.0
        %551 = vmatpush.msra.mxu0 0.0
        %552 = vmatpush.msra.mxu0 0.0
        %553 = vmatpush.msra.mxu0 %v537
        %554 = vmatpush.msra.mxu0 %v523
        %555 = vmatpush.msra.mxu0 %v521
        %556 = vmatpush.msra.mxu0 %v519
        %557 = vmatpush.msra.mxu0 %v517
        %558 = vmatmul.f32.gmra.mxu0 %v534
        %v559 = vpop.f32.mrf.mxu0
        %v560 = vadd.f32 %v530, %v559
        %561 = vdwg.mxu0
        %562 = vmatpush.msra.mxu0 0.0
        %563 = vmatpush.msra.mxu0 0.0
        %564 = vmatpush.msra.mxu0 0.0
        %565 = vmatpush.msra.mxu0 0.0
        %566 = vmatpush.msra.mxu0 0.0
        %567 = vmatpush.msra.mxu0 0.0
        %568 = vmatpush.msra.mxu0 0.0
        %569 = vmatpush.msra.mxu0 0.0
        %570 = vmatpush.msra.mxu0 0.0
        %571 = vmatpush.msra.mxu0 0.0
        %572 = vmatpush.msra.mxu0 0.0
        %573 = vmatpush.msra.mxu0 %v540
        %574 = vmatpush.msra.mxu0 %v524
        %575 = vmatpush.msra.mxu0 %v522
        %576 = vmatpush.msra.mxu0 %v520
        %577 = vmatpush.msra.mxu0 %v518
        %578 = vmatmul.f32.gmra.mxu0 %v534
        %v579 = vpop.f32.mrf.mxu0
        %v580 = vadd.f32 %v530, %v579
        %581 = vdwg.mxu0
        %v582 = vmax.f32 %v560, 0.0
        %v583 = vmax.f32 %v580, 0.0
        %v585 = vrot.slane %v582, 4
        %v587 = vadd.f32 %v582, %v585
        %v588 = vld [vmem:[%s3] sm:$0xff]
        %v589 = vld [vmem:[%s3 + $0x8] sm:$0xff]
        %v590 = vld [vmem:[%s3 + $0x10] sm:$0xff]
        %v591 = vld [vmem:[%s3 + $0x18] sm:$0xff]
        %v592 = vld [vmem:[%s4] sm:$0xff]
        %v593 = vld [vmem:[%s4 + $0x8] sm:$0xff]
        %v594 = vld [vmem:[%s4 + $0x10] sm:$0xff]
        %v595 = vld [vmem:[%s4 + $0x18] sm:$0xff]
        %597 = vset.pattern.permute.xlu0 0
        %598 = vperm.xlu0 %597, %v592
        %v599 = vpop.permute.xlu0 %598
        %602 = vset.pattern.permute.xlu0 0
        %603 = vperm.xlu0 %602, %v593
        %v604 = vpop.permute.xlu0 %603
        %607 = vset.pattern.permute.xlu0 0
        %608 = vperm.xlu0 %607, %v594
        %v609 = vpop.permute.xlu0 %608
        %612 = vset.pattern.permute.xlu0 0
        %613 = vperm.xlu0 %612, %v595
        %v614 = vpop.permute.xlu0 %613
        %vm616 = vcmask 31744
        %v618 = vsel %vm616, %v588, 0
        %v621 = vsel %vm616, %v589, 0
        %v624 = vsel %vm616, %v590, 0
        %v627 = vsel %vm616, %v591, 0
        %v630 = vsel %vm516, %v587, 0
        %632 = vmatpush.msra.mxu0 0.0
        %633 = vmatpush.msra.mxu0 0.0
        %634 = vmatpush.msra.mxu0 0.0
        %635 = vmatpush.msra.mxu0 0.0
        %636 = vmatpush.msra.mxu0 0.0
        %637 = vmatpush.msra.mxu0 0.0
        %638 = vmatpush.msra.mxu0 0.0
        %639 = vmatpush.msra.mxu0 0.0
        %640 = vmatpush.msra.mxu0 0.0
        %641 = vmatpush.msra.mxu0 0.0
        %642 = vmatpush.msra.mxu0 0.0
        %643 = vmatpush.msra.mxu0 0.0
        %644 = vmatpush.msra.mxu0 0.0
        %645 = vmatpush.msra.mxu0 0.0
        %646 = vmatpush.msra.mxu0 0.0
        %647 = vmatpush.msra.mxu0 %v630
        %648 = vmatmul.f32.gmra.mxu0 %v618
        %v649 = vpop.f32.mrf.mxu0
        %v650 = vadd.f32 %v599, %v649
        %651 = vmatmul.f32.gmra.mxu0 %v621
        %v652 = vpop.f32.mrf.mxu0
        %v653 = vadd.f32 %v604, %v652
        %654 = vmatmul.f32.gmra.mxu0 %v624
        %v655 = vpop.f32.mrf.mxu0
        %v656 = vadd.f32 %v609, %v655
        %657 = vmatmul.f32.gmra.mxu0 %v627
        %v658 = vpop.f32.mrf.mxu0
        %v659 = vadd.f32 %v614, %v658
        %660 = vdwg.mxu0
        %v661 = vmax.f32 %v650, 0.0
        %v662 = vmax.f32 %v653, 0.0
        %v663 = vmax.f32 %v656, 0.0
        %v664 = vmax.f32 %v659, 0.0
        %v665 = vld [vmem:[%s5] sm:$0x3]
        %v666 = vld [vmem:[%s6] sm:$0x3]
        %668 = vset.pattern.permute.xlu0 0
        %669 = vperm.xlu0 %668, %v666
        %v670 = vpop.permute.xlu0 %669
        %vm672 = vcmask 261120
        %v674 = vsel %vm672, %v665, 0
        %676 = vmatpush.msra.mxu0 0.0
        %677 = vmatpush.msra.mxu0 0.0
        %678 = vmatpush.msra.mxu0 0.0
        %679 = vmatpush.msra.mxu0 0.0
        %680 = vmatpush.msra.mxu0 0.0
        %681 = vmatpush.msra.mxu0 0.0
        %682 = vmatpush.msra.mxu0 0.0
        %683 = vmatpush.msra.mxu0 0.0
        %684 = vmatpush.msra.mxu0 0.0
        %685 = vmatpush.msra.mxu0 0.0
        %686 = vmatpush.msra.mxu0 0.0
        %687 = vmatpush.msra.mxu0 0.0
        %688 = vmatpush.msra.mxu0 %v664
        %689 = vmatpush.msra.mxu0 %v663
        %690 = vmatpush.msra.mxu0 %v662
        %691 = vmatpush.msra.mxu0 %v661
        %692 = vmatmul.f32.gmra.mxu0 %v674
        %v693 = vpop.f32.mrf.mxu0
        %v694 = vadd.f32 %v670, %v693
        %695 = vdwg.mxu0
        %v697 = vrot.slane %v694, 1
        %v699 = vmax.f32 %v694, %v697
        %v700 = vsub.f32 %v694, %v699
        %v701 = vmul.f32 %v700, 1.442695
        %v702 = vpow.pop %v701
        %v704 = vrot.slane %v699, 7
        %v706 = vsub.f32 %v694, %v704
        %v707 = vmul.f32 %v706, 1.442695
        %v708 = vpow.pop %v707
        %v710 = vrot.slane %v708, 1
        %v712 = vadd.f32 %v702, %v710
        %v713 = vrcp.pop %v712
        %v714 = vmul.f32 %v712, %v713
        %v715 = vsub.f32 1.0, %v714
        %v716 = vmul.f32 %v713, %v715
        %v717 = vadd.f32 %v713, %v716
        %vm718 = vweird.f32 %v712
        %vm719 = vweird.f32 %v713
        %vm720 = vmor %vm718, %vm719
        %v721 = vsel %vm720, %v713, %v717
        %v722 = vand.u32 2147483647, %v712
        %vm723 = vcmp.eq.f32.partialorder %v722, 8.507059e+37
        %v724 = vand.u32 %v712, 2147483648
        %v725 = vor.u32 1.1754944e-38, %v724
        %v726 = vsel %vm723, %v725, %v721
        %v727 = vmul.f32 %v702, %v726
        %v728 = vperm.slane %v727, 0
        %729 = vxpose.xlu0.b32.start [1/16] %v728, 128
        %730 = vxpose.xlu0.b32.cont [2/16] 0.0, 128
        %731 = vxpose.xlu0.b32.cont [3/16] 0.0, 128
        %732 = vxpose.xlu0.b32.cont [4/16] 0.0, 128
        %733 = vxpose.xlu0.b32.cont [5/16] 0.0, 128
        %734 = vxpose.xlu0.b32.cont [6/16] 0.0, 128
        %735 = vxpose.xlu0.b32.cont [7/16] 0.0, 128
        %736 = vxpose.xlu0.b32.cont [8/16] 0.0, 128
        %737 = vxpose.xlu0.b32.cont [9/16] 0.0, 128
        %738 = vxpose.xlu0.b32.cont [10/16] 0.0, 128
        %739 = vxpose.xlu0.b32.cont [11/16] 0.0, 128
        %740 = vxpose.xlu0.b32.cont [12/16] 0.0, 128
        %741 = vxpose.xlu0.b32.cont [13/16] 0.0, 128
        %742 = vxpose.xlu0.b32.cont [14/16] 0.0, 128
        %743 = vxpose.xlu0.b32.cont [15/16] 0.0, 128
        %744 = vxpose.xlu0.b32.end [16/16] 0.0, 128
        %v745 = vpop.trf.xlu0
        %v746 = vpop.trf.xlu0
        %v747 = vpop.trf.xlu0
        %v748 = vpop.trf.xlu0
        %v749 = vpop.trf.xlu0
        %v750 = vpop.trf.xlu0
        %v751 = vpop.trf.xlu0
        %v752 = vpop.trf.xlu0
        %v753 = vpop.trf.xlu0
        %v754 = vpop.trf.xlu0
        %v755 = vpop.trf.xlu0
        %v756 = vpop.trf.xlu0
        %v757 = vpop.trf.xlu0
        %v758 = vpop.trf.xlu0
        %v759 = vpop.trf.xlu0
        %v760 = vpop.trf.xlu0
        %762 = vset.pattern.permute.xlu0 0
        %763 = vperm.xlu0 %762, %v745
        %v764 = vpop.permute.xlu0 %763
        %v766 = vmul.f32 %v582, %v764
        %v767 = vmul.f32 %v583, %v764
        %v770 = vrot.slane %v766, 4
        %v771 = vrot.slane %v767, 4
        %v774 = vadd.f32 %v766, %v770
        %v775 = vadd.f32 %v767, %v771
        %v778 = vrot.slane %v775, 4
        %v779 = vsel %vm516, %v774, %v778
        %781 = vst [vmem:[%s271] sm:$0xff] %v779
        %s782 = sand.u32 %s181, 1
        %s783 = scalar_lea.sflag [#allocation4], %s782
        %s784 = sand.u32 %s181, 1
        %s785 = smul.addr %s784, 8
        %s786 = scalar_lea.vmem [#allocation3], %s785
        // Predicated region
        $region49: #{tpu_custom_call.1} parent=47 // pred_check
          %p787 = pneg %p191
        $region50: #{tpu_custom_call.1} parent=47 // pred_check_branch
          %789 = sbr.rel (%p787) target = $region52
        $region51: #{tpu_custom_call.1} parent=47 // pred_region
          %791 = vsyncadd %s783, 0
          %s792 = smul.addr %s21, 2
          %s793 = smul.addr %s792, 4
          %s794 = scalar_lea.hbm %s7, %s793
          %s796 = sshll.u32 %s786, 4
          %s797 = int_to_ptr.vmem [resolvable:$true] %s796
          %s798 = sshll.u32 %s794, 4
          %s799 = int_to_ptr.hbm [resolvable:$true] %s798
          %801 = dma.vmem_to_hbm [thread:$0]  %s797, 128, %s799, %s783
        $region52: #{tpu_custom_call.1} parent=47 // pred_fallthru
          _
      $region48: #{tpu_custom_call.1} parent=5 // pred_fallthru
        _
      %p802 = scmp.le.s32.totalorder 2, %s16
      // Predicated region
      $region53: #{tpu_custom_call.1} parent=5 // pred_check
        %p803 = pneg %p802
      $region54: #{tpu_custom_call.1} parent=5 // pred_check_branch
        %805 = sbr.rel (%p803) target = $region56
      $region55: #{tpu_custom_call.1} parent=5 // pred_region
        %s806 = ssub.s32 %s16, 2
        // Predicated region
        $region57: #{tpu_custom_call.1} parent=55 // pred_check
          %p807 = pneg %p197
        $region58: #{tpu_custom_call.1} parent=55 // pred_check_branch
          %809 = sbr.rel (%p807) target = $region60
        $region59: #{tpu_custom_call.1} parent=55 // pred_region
          %s810 = sand.u32 %s182, 1
          %s811 = scalar_lea.sflag [#allocation4], %s810
          %s812 = sand.u32 %s182, 1
          %s813 = smul.addr %s812, 8
          %s814 = scalar_lea.vmem [#allocation3], %s813
          %816 = dma.done %s811, 128
        $region60: #{tpu_custom_call.1} parent=55 // pred_fallthru
          _
      $region56: #{tpu_custom_call.1} parent=5 // pred_fallthru
        _
    $region6: #{tpu_custom_call.1} parent=1 // loop_footer
      %s20 = sadd.s32 1, %s16
    $region7: #{tpu_custom_call.1} parent=1 // loop_footer_branch
      %15 = sbr.rel target = $region3
    $region8: #{tpu_custom_call.1} parent=1 // loop_exit
      _
    %817 = vsyncpa [#allocation4], 1
    %s818 = scalar_lea.sflag [#allocation4], 1
    %819 = vsyncpa %s818, 1

</llo_original>
